<compile_context>
chip_gen: v7x
topology: tpu7x:2x2x1
jax: 0.10.0
libtpu: 0.0.40
codegen_flags: <defaults>
</compile_context>

<pallas_src>
import jax
import jax.numpy as jnp
from jax import lax
from jax.experimental import pallas as pl
from jax.experimental.pallas import tpu as pltpu

# Small, forward-consistent shapes.
B, L, H = 2, 8, 32          # batch, seq len, hidden size
BL = B * L
NHEAD = 2
HEAD_DIM = H // NHEAD
FF = 64                     # feed-forward inner dim
VOCAB = 64
NCLS = 4                    # num_classes
NCLS_PAD = 128              # lane-dense classifier output width (sliced to NCLS outside)
NEG = -1e9
LN_EPS = 1e-12              # BERT layernorm eps

assert L & (L - 1) == 0, "L must be a power of two for the shift/mask index math"
LOG2_L = L.bit_length() - 1

LANE = 128
E_PAD = 128                 # padded combined embedding-table rows: [word | seg | pos | zeros]
assert VOCAB + 2 + L <= E_PAD

# weight slab row offsets (all multiples of 16 -> clean bf16 sublane tiles)
R_EMB, R_QKV, R_WO, R_W1, R_W2, R_WP, R_WC = 0, 128, 160, 192, 224, 288, 320
W_ROWS = 352

# row-vector slab rows (f32 (16,128))
ROW_G1, ROW_BE1, ROW_G2, ROW_BE2 = 0, 1, 2, 3
ROW_BO, ROW_B2, ROW_BP = 4, 5, 6
ROW_BQKV, ROW_B1, ROW_BC = 7, 8, 9
ROW_SLAB_ROWS = 16


# ----------------------------- helpers (traced inside the kernel) --------------

def _layernorm(x, gamma, beta):
    mu = jnp.mean(x, axis=-1, keepdims=True)
    var = jnp.mean(jnp.square(x - mu), axis=-1, keepdims=True)
    return (x - mu) * lax.rsqrt(var + LN_EPS) * gamma + beta


def _gelu(x):
    # tanh-approximate GELU (EUP tanh).
    # TODO(synk): exact erf-based GELU if strict checkpoint parity is required.
    c = jnp.float32(0.7978845608028654)  # sqrt(2/pi)
    return 0.5 * x * (1.0 + jnp.tanh(c * (x + 0.044715 * x * x * x)))


# ----------------------------- fused kernel ------------------------------------

def bert_kernel(valid_ref,            # SMEM (B,) int32
                ids_ref,              # VMEM (BL, 2) int32 : [token_id, segment_id] per row
                rows_ref,             # VMEM (16, 128) f32 : LN params + all bias rows
                w_ref,                # VMEM (352, 128) bf16 : emb|Wqkv|Wo|W1|W2|Wp|Wc slab
                logits_ref):          # out (B, NCLS_PAD) f32
    f32, bf16 = jnp.float32, jnp.bfloat16

    # --- fused embedding lookup: one-hot(token | segment | position) @ emb table ---
    tok = ids_ref[:, 0:1]                                        # (BL, 1) int32
    seg = ids_ref[:, 1:2]                                        # (BL, 1) int32
    pos = lax.broadcasted_iota(jnp.int32, (BL, 1), 0) & (L - 1)  # position within sequence
    ecol = lax.broadcasted_iota(jnp.int32, (BL, E_PAD), 1)
    hit = (ecol == tok) | (ecol == VOCAB + seg) | (ecol == VOCAB + 2 + pos)
    onehot = hit.astype(f32).astype(bf16)                        # (BL, E_PAD)
    emb = w_ref[R_EMB:R_EMB + E_PAD, 0:H]                        # (E_PAD, H) bf16
    x = jnp.dot(onehot, emb, preferred_element_type=f32)         # (BL, H) f32

    # --- gen_attention_mask fused with the batch block-diagonal mask --------------
    kcol = lax.broadcasted_iota(jnp.int32, (1, BL), 1)
    kcol_b = kcol >> LOG2_L                                      # key's batch index
    kcol_l = kcol & (L - 1)                                      # key's position in its batch
    vlen = jnp.zeros((1, BL), jnp.int32)
    for b in range(B):                                           # static unroll; SMEM scalar reads
        vlen = jnp.where(kcol_b == b, valid_ref[b], vlen)
    key_ok = kcol_l < vlen                                       # (1, BL): mask[b, l] = l < valid[b]
    row_b = lax.broadcasted_iota(jnp.int32, (BL, BL), 0) >> LOG2_L
    col_b = lax.broadcasted_iota(jnp.int32, (BL, BL), 1) >> LOG2_L
    allowed = (row_b == col_b) & key_ok                          # (BL, BL)
    bias = jnp.where(allowed, jnp.float32(0.0), jnp.float32(NEG))

    # --- multi-head self-attention with a single fused QKV matmul ------------------
    xb = x.astype(bf16)
    qkv = (jnp.dot(xb, w_ref[R_QKV:R_QKV + H, 0:3 * H], preferred_element_type=f32)
           + rows_ref[ROW_BQKV:ROW_BQKV + 1, 0:3 * H])           # (BL, 3H) f32
    scale = jnp.float32(1.0 / (HEAD_DIM ** 0.5))
    cdims = (((1,), (1,)), ((), ()))                             # contract last dims (no .T)
    ctxs = []
    for h in range(NHEAD):                                       # static unroll over heads
        qh = qkv[:, h * HEAD_DIM:(h + 1) * HEAD_DIM].astype(bf16)
        kh = qkv[:, H + h * HEAD_DIM:H + (h + 1) * HEAD_DIM].astype(bf16)
        vh = qkv[:, 2 * H + h * HEAD_DIM:2 * H + (h + 1) * HEAD_DIM].astype(bf16)
        s = lax.dot_general(qh, kh, cdims, preferred_element_type=f32) * scale + bias
        # max-subtraction dropped: masked scores are exactly -1e9 (exp underflows to 0)
        # TODO(synk): a valid_length of 0 would zero the exp-sum and produce inf here.
        p = jnp.exp(s)
        p = p * pl.reciprocal(jnp.sum(p, axis=-1, keepdims=True), approx=True)
        ctxs.append(jnp.dot(p.astype(bf16), vh, preferred_element_type=f32))
    ctx = jnp.concatenate(ctxs, axis=-1)                         # (BL, H) f32
    attn = (jnp.dot(ctx.astype(bf16), w_ref[R_WO:R_WO + H, 0:H], preferred_element_type=f32)
            + rows_ref[ROW_BO:ROW_BO + 1, 0:H])

    # --- add & norm -> feed-forward -> add & norm ----------------------------------
    h1 = _layernorm(x + attn, rows_ref[ROW_G1:ROW_G1 + 1, 0:H],
                    rows_ref[ROW_BE1:ROW_BE1 + 1, 0:H])
    ff = _gelu(jnp.dot(h1.astype(bf16), w_ref[R_W1:R_W1 + H, 0:FF],
                       preferred_element_type=f32) + rows_ref[ROW_B1:ROW_B1 + 1, 0:FF])
    ff = (jnp.dot(ff.astype(bf16), w_ref[R_W2:R_W2 + FF, 0:H], preferred_element_type=f32)
          + rows_ref[ROW_B2:ROW_B2 + 1, 0:H])
    hidden = _layernorm(h1 + ff, rows_ref[ROW_G2:ROW_G2 + 1, 0:H],
                        rows_ref[ROW_BE2:ROW_BE2 + 1, 0:H])      # (BL, H)

    # --- pooler (tanh(dense(CLS))) + classifier -------------------------------------
    cls = jnp.concatenate([hidden[b * L:b * L + 1, :] for b in range(B)], axis=0)   # (B, H)
    pooled = jnp.tanh(jnp.dot(cls.astype(bf16), w_ref[R_WP:R_WP + H, 0:H],
                              preferred_element_type=f32) + rows_ref[ROW_BP:ROW_BP + 1, 0:H])
    # TODO(synk): training-mode dropout (dr_rate) omitted; eval-mode dropout is identity.
    logits_ref[...] = (jnp.dot(pooled.astype(bf16), w_ref[R_WC:R_WC + H, :],
                               preferred_element_type=f32)
                       + rows_ref[ROW_BC:ROW_BC + 1, :])


# ----------------------------- wrappers -----------------------------------------

def pack_params(p):
    """Pack all parameters into one f32 row-vector slab and one bf16 weight slab."""
    # combined embedding table (E_PAD, H): [word | seg | pos | zeros]
    emb_all = jnp.zeros((E_PAD, H), jnp.float32)
    emb_all = emb_all.at[:VOCAB].set(p["word_emb"])
    emb_all = emb_all.at[VOCAB:VOCAB + 2].set(p["seg_emb"])
    emb_all = emb_all.at[VOCAB + 2:VOCAB + 2 + L].set(p["pos_emb"])

    w_slab = jnp.zeros((W_ROWS, LANE), jnp.float32)
    w_slab = w_slab.at[R_EMB:R_EMB + E_PAD, :H].set(emb_all)
    w_qkv = jnp.concatenate([p["wq"], p["wk"], p["wv"]], axis=1)         # (H, 3H)
    w_slab = w_slab.at[R_QKV:R_QKV + H, :3 * H].set(w_qkv)
    w_slab = w_slab.at[R_WO:R_WO + H, :H].set(p["wo"])
    w_slab = w_slab.at[R_W1:R_W1 + H, :FF].set(p["w1"])
    w_slab = w_slab.at[R_W2:R_W2 + FF, :H].set(p["w2"])
    w_slab = w_slab.at[R_WP:R_WP + H, :H].set(p["wp"])
    w_slab = w_slab.at[R_WC:R_WC + H, :NCLS].set(p["wc"])
    w_slab = w_slab.astype(jnp.bfloat16)

    rows = jnp.zeros((ROW_SLAB_ROWS, LANE), jnp.float32)
    rows = rows.at[ROW_G1, :H].set(p["g1"][0])
    rows = rows.at[ROW_BE1, :H].set(p["be1"][0])
    rows = rows.at[ROW_G2, :H].set(p["g2"][0])
    rows = rows.at[ROW_BE2, :H].set(p["be2"][0])
    rows = rows.at[ROW_BO, :H].set(p["bo"][0])
    rows = rows.at[ROW_B2, :H].set(p["b2"][0])
    rows = rows.at[ROW_BP, :H].set(p["bp"][0])
    rows = rows.at[ROW_BQKV, :3 * H].set(
        jnp.concatenate([p["bq"][0], p["bk"][0], p["bv"][0]], axis=0))
    rows = rows.at[ROW_B1, :FF].set(p["b1"][0])
    rows = rows.at[ROW_BC, :NCLS].set(p["bc"][0])
    return rows, w_slab


def bert_classifier_forward(token_ids, valid_length, segment_ids, params):
    rows, w_slab = pack_params(params)
    valid = valid_length.astype(jnp.int32).reshape(B)
    ids = jnp.stack([token_ids.reshape(BL), segment_ids.reshape(BL)],
                    axis=1).astype(jnp.int32)                       # (BL, 2)

    logits_pad = pl.pallas_call(
        bert_kernel,
        out_shape=jax.ShapeDtypeStruct((B, NCLS_PAD), jnp.float32),
        in_specs=[pl.BlockSpec(memory_space=pltpu.MemorySpace.SMEM),   # valid lengths
                  pl.BlockSpec(memory_space=pltpu.MemorySpace.VMEM),   # token/segment ids
                  pl.BlockSpec(memory_space=pltpu.MemorySpace.VMEM),   # row-vector slab
                  pl.BlockSpec(memory_space=pltpu.MemorySpace.VMEM)],  # weight slab
        out_specs=pl.BlockSpec(memory_space=pltpu.MemorySpace.VMEM),
    )(valid, ids, rows, w_slab)
    return logits_pad[:, :NCLS]


# ----------------------------- parameter init ------------------------------------

def init_params(key):
    ks = iter(jax.random.split(key, 32))
    n = lambda shape, s=0.02: (s * jax.random.normal(next(ks), shape)).astype(jnp.float32)
    return {
        "word_emb": n((VOCAB, H)),
        "seg_emb": n((2, H)),
        "pos_emb": n((L, H)),
        "wq": n((H, H)), "bq": jnp.zeros((1, H), jnp.float32),
        "wk": n((H, H)), "bk": jnp.zeros((1, H), jnp.float32),
        "wv": n((H, H)), "bv": jnp.zeros((1, H), jnp.float32),
        "wo": n((H, H)), "bo": jnp.zeros((1, H), jnp.float32),
        "g1": jnp.ones((1, H), jnp.float32), "be1": jnp.zeros((1, H), jnp.float32),
        "w1": n((H, FF)), "b1": jnp.zeros((1, FF), jnp.float32),
        "w2": n((FF, H)), "b2": jnp.zeros((1, H), jnp.float32),
        "g2": jnp.ones((1, H), jnp.float32), "be2": jnp.zeros((1, H), jnp.float32),
        "wp": n((H, H)), "bp": jnp.zeros((1, H), jnp.float32),
        "wc": n((H, NCLS)), "bc": jnp.zeros((1, NCLS), jnp.float32),
    }


if __name__ == "__main__":
    key = jax.random.PRNGKey(0)
    pkey, tkey, skey = jax.random.split(key, 3)
    params = init_params(pkey)

    token_ids = jax.random.randint(tkey, (B, L), 0, VOCAB, dtype=jnp.int32)
    segment_ids = jax.random.randint(skey, (B, L), 0, 2, dtype=jnp.int32)
    valid_length = jnp.array([5, L], dtype=jnp.int32)

    logits = bert_classifier_forward(token_ids, valid_length, segment_ids, params)
    logits = jax.block_until_ready(logits)
    assert logits.shape == (B, NCLS) and bool(jnp.all(jnp.isfinite(logits)))
    print("KERNEL_OK")
</pallas_src>

<mosaic_0001>
module attributes {stable_mosaic.version = 11 : i64} {
  func.func @bert_kernel(%arg0: memref<2xi32, #tpu.memory_space<smem>>, %arg1: memref<16x2xi32, #tpu.memory_space<vmem>>, %arg2: memref<16x128xf32, #tpu.memory_space<vmem>>, %arg3: memref<352x128xbf16, #tpu.memory_space<vmem>>, %arg4: memref<2x128xf32, #tpu.memory_space<vmem>>) attributes {dimension_semantics = [], scalar_prefetch = 0 : i64, scratch_operands = 0 : i64, tpu.core_type = #tpu.core_type<tc>} {
    %c0 = arith.constant 0 : index
    %c0_0 = arith.constant 0 : index
    %0 = vector.load %arg1[%c0, %c0_0] : memref<16x2xi32, #tpu.memory_space<vmem>>, vector<16x1xi32>
    %c0_1 = arith.constant 0 : index
    %c1 = arith.constant 1 : index
    %1 = vector.load %arg1[%c0_1, %c1] : memref<16x2xi32, #tpu.memory_space<vmem>>, vector<16x1xi32>
    %2 = tpu.iota {dimensions = array<i32: 0>} : vector<16x1xi32>
    %c7_i32 = arith.constant 7 : i32
    %3 = vector.broadcast %c7_i32 : i32 to vector<16x1xi32>
    %4 = arith.andi %2, %3 : vector<16x1xi32>
    %5 = tpu.iota {dimensions = array<i32: 1>} : vector<16x128xi32>
    %6 = vector.broadcast %0 : vector<16x1xi32> to vector<16x128xi32>
    %7 = arith.cmpi eq, %5, %6 : vector<16x128xi32>
    %c64_i32 = arith.constant 64 : i32
    %8 = vector.broadcast %c64_i32 : i32 to vector<16x1xi32>
    %9 = arith.addi %8, %1 : vector<16x1xi32>
    %10 = vector.broadcast %9 : vector<16x1xi32> to vector<16x128xi32>
    %11 = arith.cmpi eq, %5, %10 : vector<16x128xi32>
    %12 = arith.ori %7, %11 : vector<16x128xi1>
    %c66_i32 = arith.constant 66 : i32
    %13 = vector.broadcast %c66_i32 : i32 to vector<16x1xi32>
    %14 = arith.addi %13, %4 : vector<16x1xi32>
    %15 = vector.broadcast %14 : vector<16x1xi32> to vector<16x128xi32>
    %16 = arith.cmpi eq, %5, %15 : vector<16x128xi32>
    %17 = arith.ori %12, %16 : vector<16x128xi1>
    %18 = arith.extui %17 : vector<16x128xi1> to vector<16x128xi32>
    %19 = arith.sitofp %18 : vector<16x128xi32> to vector<16x128xf32>
    %20 = arith.truncf %19 : vector<16x128xf32> to vector<16x128xbf16>
    %c0_2 = arith.constant 0 : index
    %c0_3 = arith.constant 0 : index
    %21 = vector.load %arg3[%c0_2, %c0_3] : memref<352x128xbf16, #tpu.memory_space<vmem>>, vector<128x32xbf16>
    %cst = arith.constant dense<0.000000e+00> : vector<16x32xf32>
    %22 = tpu.matmul %20, %21, %cst {dimension_numbers = #tpu.dot_dimension_numbers<[1], [0], [0], [1], [0, 0, 1, 1], [], []>} : vector<16x128xbf16>, vector<128x32xbf16>, vector<16x32xf32> -> vector<16x32xf32>
    %23 = tpu.iota {dimensions = array<i32: 1>} : vector<1x16xi32>
    %c3_i32 = arith.constant 3 : i32
    %24 = vector.broadcast %c3_i32 : i32 to vector<1x16xi32>
    %25 = arith.shrsi %23, %24 : vector<1x16xi32>
    %c7_i32_4 = arith.constant 7 : i32
    %26 = vector.broadcast %c7_i32_4 : i32 to vector<1x16xi32>
    %27 = arith.andi %23, %26 : vector<1x16xi32>
    %c0_i32 = arith.constant 0 : i32
    %28 = vector.broadcast %c0_i32 : i32 to vector<1x16xi32>
    %c0_i32_5 = arith.constant 0 : i32
    %29 = vector.broadcast %c0_i32_5 : i32 to vector<1x16xi32>
    %30 = arith.cmpi eq, %25, %29 : vector<1x16xi32>
    %c0_6 = arith.constant 0 : index
    %31 = memref.load %arg0[%c0_6] : memref<2xi32, #tpu.memory_space<smem>>
    %32 = vector.broadcast %31 : i32 to vector<1x16xi32>
    %33 = arith.select %30, %32, %28 : vector<1x16xi1>, vector<1x16xi32>
    %c1_i32 = arith.constant 1 : i32
    %34 = vector.broadcast %c1_i32 : i32 to vector<1x16xi32>
    %35 = arith.cmpi eq, %25, %34 : vector<1x16xi32>
    %c1_7 = arith.constant 1 : index
    %36 = memref.load %arg0[%c1_7] : memref<2xi32, #tpu.memory_space<smem>>
    %37 = vector.broadcast %36 : i32 to vector<1x16xi32>
    %38 = arith.select %35, %37, %33 : vector<1x16xi1>, vector<1x16xi32>
    %39 = arith.cmpi slt, %27, %38 : vector<1x16xi32>
    %40 = tpu.iota {dimensions = array<i32: 0>} : vector<16x16xi32>
    %c3_i32_8 = arith.constant 3 : i32
    %41 = vector.broadcast %c3_i32_8 : i32 to vector<16x16xi32>
    %42 = arith.shrsi %40, %41 : vector<16x16xi32>
    %43 = tpu.iota {dimensions = array<i32: 1>} : vector<16x16xi32>
    %c3_i32_9 = arith.constant 3 : i32
    %44 = vector.broadcast %c3_i32_9 : i32 to vector<16x16xi32>
    %45 = arith.shrsi %43, %44 : vector<16x16xi32>
    %46 = arith.cmpi eq, %42, %45 : vector<16x16xi32>
    %47 = vector.broadcast %39 : vector<1x16xi1> to vector<16x16xi1>
    %48 = arith.andi %46, %47 : vector<16x16xi1>
    %cst_10 = arith.constant 0.000000e+00 : f32
    %cst_11 = arith.constant -1.000000e+09 : f32
    %49 = vector.broadcast %cst_10 : f32 to vector<16x16xf32>
    %50 = vector.broadcast %cst_11 : f32 to vector<16x16xf32>
    %51 = arith.select %48, %49, %50 : vector<16x16xi1>, vector<16x16xf32>
    %52 = arith.truncf %22 : vector<16x32xf32> to vector<16x32xbf16>
    %c128 = arith.constant 128 : index
    %c0_12 = arith.constant 0 : index
    %53 = vector.load %arg3[%c128, %c0_12] : memref<352x128xbf16, #tpu.memory_space<vmem>>, vector<32x96xbf16>
    %cst_13 = arith.constant dense<0.000000e+00> : vector<16x96xf32>
    %54 = tpu.matmul %52, %53, %cst_13 {dimension_numbers = #tpu.dot_dimension_numbers<[1], [0], [0], [1], [0, 0, 1, 1], [], []>} : vector<16x32xbf16>, vector<32x96xbf16>, vector<16x96xf32> -> vector<16x96xf32>
    %c7 = arith.constant 7 : index
    %c0_14 = arith.constant 0 : index
    %55 = vector.load %arg2[%c7, %c0_14] : memref<16x128xf32, #tpu.memory_space<vmem>>, vector<1x96xf32>
    %56 = vector.broadcast %55 : vector<1x96xf32> to vector<16x96xf32>
    %57 = arith.addf %54, %56 : vector<16x96xf32>
    %58 = vector.extract_strided_slice %57 {offsets = [0, 0], sizes = [16, 16], strides = [1, 1]} : vector<16x96xf32> to vector<16x16xf32>
    %59 = arith.truncf %58 : vector<16x16xf32> to vector<16x16xbf16>
    %60 = vector.extract_strided_slice %57 {offsets = [0, 32], sizes = [16, 16], strides = [1, 1]} : vector<16x96xf32> to vector<16x16xf32>
    %61 = arith.truncf %60 : vector<16x16xf32> to vector<16x16xbf16>
    %62 = vector.extract_strided_slice %57 {offsets = [0, 64], sizes = [16, 16], strides = [1, 1]} : vector<16x96xf32> to vector<16x16xf32>
    %63 = arith.truncf %62 : vector<16x16xf32> to vector<16x16xbf16>
    %cst_15 = arith.constant dense<0.000000e+00> : vector<16x16xf32>
    %64 = tpu.matmul %59, %61, %cst_15 {dimension_numbers = #tpu.dot_dimension_numbers<[1], [1], [0], [0], [0, 0, 1, 0], [], []>} : vector<16x16xbf16>, vector<16x16xbf16>, vector<16x16xf32> -> vector<16x16xf32>
    %cst_16 = arith.constant 2.500000e-01 : f32
    %65 = vector.broadcast %cst_16 : f32 to vector<16x16xf32>
    %66 = arith.mulf %64, %65 : vector<16x16xf32>
    %67 = arith.addf %66, %51 : vector<16x16xf32>
    %68 = math.exp %67 : vector<16x16xf32>
    %cst_17 = arith.constant dense<0.000000e+00> : vector<16xf32>
    %69 = vector.multi_reduction <add>, %68, %cst_17 [1] : vector<16x16xf32> to vector<16xf32>
    %70 = vector.shape_cast %69 : vector<16xf32> to vector<16x1xf32>
    %71 = tpu.reciprocal %70 {approx = true} : vector<16x1xf32> -> vector<16x1xf32>
    %72 = vector.broadcast %71 : vector<16x1xf32> to vector<16x16xf32>
    %73 = arith.mulf %68, %72 : vector<16x16xf32>
    %74 = arith.truncf %73 : vector<16x16xf32> to vector<16x16xbf16>
    %cst_18 = arith.constant dense<0.000000e+00> : vector<16x16xf32>
    %75 = tpu.matmul %74, %63, %cst_18 {dimension_numbers = #tpu.dot_dimension_numbers<[1], [0], [0], [1], [0, 0, 1, 1], [], []>} : vector<16x16xbf16>, vector<16x16xbf16>, vector<16x16xf32> -> vector<16x16xf32>
    %76 = vector.extract_strided_slice %57 {offsets = [0, 16], sizes = [16, 16], strides = [1, 1]} : vector<16x96xf32> to vector<16x16xf32>
    %77 = arith.truncf %76 : vector<16x16xf32> to vector<16x16xbf16>
    %78 = vector.extract_strided_slice %57 {offsets = [0, 48], sizes = [16, 16], strides = [1, 1]} : vector<16x96xf32> to vector<16x16xf32>
    %79 = arith.truncf %78 : vector<16x16xf32> to vector<16x16xbf16>
    %80 = vector.extract_strided_slice %57 {offsets = [0, 80], sizes = [16, 16], strides = [1, 1]} : vector<16x96xf32> to vector<16x16xf32>
    %81 = arith.truncf %80 : vector<16x16xf32> to vector<16x16xbf16>
    %cst_19 = arith.constant dense<0.000000e+00> : vector<16x16xf32>
    %82 = tpu.matmul %77, %79, %cst_19 {dimension_numbers = #tpu.dot_dimension_numbers<[1], [1], [0], [0], [0, 0, 1, 0], [], []>} : vector<16x16xbf16>, vector<16x16xbf16>, vector<16x16xf32> -> vector<16x16xf32>
    %cst_20 = arith.constant 2.500000e-01 : f32
    %83 = vector.broadcast %cst_20 : f32 to vector<16x16xf32>
    %84 = arith.mulf %82, %83 : vector<16x16xf32>
    %85 = arith.addf %84, %51 : vector<16x16xf32>
    %86 = math.exp %85 : vector<16x16xf32>
    %cst_21 = arith.constant dense<0.000000e+00> : vector<16xf32>
    %87 = vector.multi_reduction <add>, %86, %cst_21 [1] : vector<16x16xf32> to vector<16xf32>
    %88 = vector.shape_cast %87 : vector<16xf32> to vector<16x1xf32>
    %89 = tpu.reciprocal %88 {approx = true} : vector<16x1xf32> -> vector<16x1xf32>
    %90 = vector.broadcast %89 : vector<16x1xf32> to vector<16x16xf32>
    %91 = arith.mulf %86, %90 : vector<16x16xf32>
    %92 = arith.truncf %91 : vector<16x16xf32> to vector<16x16xbf16>
    %cst_22 = arith.constant dense<0.000000e+00> : vector<16x16xf32>
    %93 = tpu.matmul %92, %81, %cst_22 {dimension_numbers = #tpu.dot_dimension_numbers<[1], [0], [0], [1], [0, 0, 1, 1], [], []>} : vector<16x16xbf16>, vector<16x16xbf16>, vector<16x16xf32> -> vector<16x16xf32>
    %94 = tpu.concatenate %75, %93 in 1 : vector<16x16xf32>, vector<16x16xf32> -> vector<16x32xf32>
    %95 = arith.truncf %94 : vector<16x32xf32> to vector<16x32xbf16>
    %c160 = arith.constant 160 : index
    %c0_23 = arith.constant 0 : index
    %96 = vector.load %arg3[%c160, %c0_23] : memref<352x128xbf16, #tpu.memory_space<vmem>>, vector<32x32xbf16>
    %cst_24 = arith.constant dense<0.000000e+00> : vector<16x32xf32>
    %97 = tpu.matmul %95, %96, %cst_24 {dimension_numbers = #tpu.dot_dimension_numbers<[1], [0], [0], [1], [0, 0, 1, 1], [], []>} : vector<16x32xbf16>, vector<32x32xbf16>, vector<16x32xf32> -> vector<16x32xf32>
    %c4 = arith.constant 4 : index
    %c0_25 = arith.constant 0 : index
    %98 = vector.load %arg2[%c4, %c0_25] : memref<16x128xf32, #tpu.memory_space<vmem>>, vector<1x32xf32>
    %99 = vector.broadcast %98 : vector<1x32xf32> to vector<16x32xf32>
    %100 = arith.addf %97, %99 : vector<16x32xf32>
    %101 = arith.addf %22, %100 : vector<16x32xf32>
    %c0_26 = arith.constant 0 : index
    %c0_27 = arith.constant 0 : index
    %102 = vector.load %arg2[%c0_26, %c0_27] : memref<16x128xf32, #tpu.memory_space<vmem>>, vector<1x32xf32>
    %c1_28 = arith.constant 1 : index
    %c0_29 = arith.constant 0 : index
    %103 = vector.load %arg2[%c1_28, %c0_29] : memref<16x128xf32, #tpu.memory_space<vmem>>, vector<1x32xf32>
    %cst_30 = arith.constant dense<0.000000e+00> : vector<16xf32>
    %104 = vector.multi_reduction <add>, %101, %cst_30 [1] : vector<16x32xf32> to vector<16xf32>
    %105 = vector.shape_cast %104 : vector<16xf32> to vector<16x1xf32>
    %cst_31 = arith.constant 3.200000e+01 : f32
    %106 = vector.broadcast %cst_31 : f32 to vector<16x1xf32>
    %107 = arith.divf %105, %106 : vector<16x1xf32>
    %108 = vector.broadcast %107 : vector<16x1xf32> to vector<16x32xf32>
    %109 = arith.subf %101, %108 : vector<16x32xf32>
    %110 = arith.mulf %109, %109 : vector<16x32xf32>
    %cst_32 = arith.constant dense<0.000000e+00> : vector<16xf32>
    %111 = vector.multi_reduction <add>, %110, %cst_32 [1] : vector<16x32xf32> to vector<16xf32>
    %112 = vector.shape_cast %111 : vector<16xf32> to vector<16x1xf32>
    %cst_33 = arith.constant 3.200000e+01 : f32
    %113 = vector.broadcast %cst_33 : f32 to vector<16x1xf32>
    %114 = arith.divf %112, %113 : vector<16x1xf32>
    %115 = vector.broadcast %107 : vector<16x1xf32> to vector<16x32xf32>
    %116 = arith.subf %101, %115 : vector<16x32xf32>
    %cst_34 = arith.constant 9.99999996E-13 : f32
    %117 = vector.broadcast %cst_34 : f32 to vector<16x1xf32>
    %118 = arith.addf %114, %117 : vector<16x1xf32>
    %119 = math.rsqrt %118 : vector<16x1xf32>
    %120 = vector.broadcast %119 : vector<16x1xf32> to vector<16x32xf32>
    %121 = arith.mulf %116, %120 : vector<16x32xf32>
    %122 = vector.broadcast %102 : vector<1x32xf32> to vector<16x32xf32>
    %123 = arith.mulf %121, %122 : vector<16x32xf32>
    %124 = vector.broadcast %103 : vector<1x32xf32> to vector<16x32xf32>
    %125 = arith.addf %123, %124 : vector<16x32xf32>
    %126 = arith.truncf %125 : vector<16x32xf32> to vector<16x32xbf16>
    %c192 = arith.constant 192 : index
    %c0_35 = arith.constant 0 : index
    %127 = vector.load %arg3[%c192, %c0_35] : memref<352x128xbf16, #tpu.memory_space<vmem>>, vector<32x64xbf16>
    %cst_36 = arith.constant dense<0.000000e+00> : vector<16x64xf32>
    %128 = tpu.matmul %126, %127, %cst_36 {dimension_numbers = #tpu.dot_dimension_numbers<[1], [0], [0], [1], [0, 0, 1, 1], [], []>} : vector<16x32xbf16>, vector<32x64xbf16>, vector<16x64xf32> -> vector<16x64xf32>
    %c8 = arith.constant 8 : index
    %c0_37 = arith.constant 0 : index
    %129 = vector.load %arg2[%c8, %c0_37] : memref<16x128xf32, #tpu.memory_space<vmem>>, vector<1x64xf32>
    %130 = vector.broadcast %129 : vector<1x64xf32> to vector<16x64xf32>
    %131 = arith.addf %128, %130 : vector<16x64xf32>
    %cst_38 = arith.constant 5.000000e-01 : f32
    %132 = vector.broadcast %cst_38 : f32 to vector<16x64xf32>
    %133 = arith.mulf %132, %131 : vector<16x64xf32>
    %cst_39 = arith.constant 4.471500e-02 : f32
    %134 = vector.broadcast %cst_39 : f32 to vector<16x64xf32>
    %135 = arith.mulf %134, %131 : vector<16x64xf32>
    %136 = arith.mulf %135, %131 : vector<16x64xf32>
    %137 = arith.mulf %136, %131 : vector<16x64xf32>
    %138 = arith.addf %131, %137 : vector<16x64xf32>
    %cst_40 = arith.constant 0.797884583 : f32
    %139 = vector.broadcast %cst_40 : f32 to vector<16x64xf32>
    %140 = arith.mulf %139, %138 : vector<16x64xf32>
    %141 = math.tanh %140 : vector<16x64xf32>
    %cst_41 = arith.constant 1.000000e+00 : f32
    %142 = vector.broadcast %cst_41 : f32 to vector<16x64xf32>
    %143 = arith.addf %142, %141 : vector<16x64xf32>
    %144 = arith.mulf %133, %143 : vector<16x64xf32>
    %145 = arith.truncf %144 : vector<16x64xf32> to vector<16x64xbf16>
    %c224 = arith.constant 224 : index
    %c0_42 = arith.constant 0 : index
    %146 = vector.load %arg3[%c224, %c0_42] : memref<352x128xbf16, #tpu.memory_space<vmem>>, vector<64x32xbf16>
    %cst_43 = arith.constant dense<0.000000e+00> : vector<16x32xf32>
    %147 = tpu.matmul %145, %146, %cst_43 {dimension_numbers = #tpu.dot_dimension_numbers<[1], [0], [0], [1], [0, 0, 1, 1], [], []>} : vector<16x64xbf16>, vector<64x32xbf16>, vector<16x32xf32> -> vector<16x32xf32>
    %c5 = arith.constant 5 : index
    %c0_44 = arith.constant 0 : index
    %148 = vector.load %arg2[%c5, %c0_44] : memref<16x128xf32, #tpu.memory_space<vmem>>, vector<1x32xf32>
    %149 = vector.broadcast %148 : vector<1x32xf32> to vector<16x32xf32>
    %150 = arith.addf %147, %149 : vector<16x32xf32>
    %151 = arith.addf %125, %150 : vector<16x32xf32>
    %c2 = arith.constant 2 : index
    %c0_45 = arith.constant 0 : index
    %152 = vector.load %arg2[%c2, %c0_45] : memref<16x128xf32, #tpu.memory_space<vmem>>, vector<1x32xf32>
    %c3 = arith.constant 3 : index
    %c0_46 = arith.constant 0 : index
    %153 = vector.load %arg2[%c3, %c0_46] : memref<16x128xf32, #tpu.memory_space<vmem>>, vector<1x32xf32>
    %cst_47 = arith.constant dense<0.000000e+00> : vector<16xf32>
    %154 = vector.multi_reduction <add>, %151, %cst_47 [1] : vector<16x32xf32> to vector<16xf32>
    %155 = vector.shape_cast %154 : vector<16xf32> to vector<16x1xf32>
    %cst_48 = arith.constant 3.200000e+01 : f32
    %156 = vector.broadcast %cst_48 : f32 to vector<16x1xf32>
    %157 = arith.divf %155, %156 : vector<16x1xf32>
    %158 = vector.broadcast %157 : vector<16x1xf32> to vector<16x32xf32>
    %159 = arith.subf %151, %158 : vector<16x32xf32>
    %160 = arith.mulf %159, %159 : vector<16x32xf32>
    %cst_49 = arith.constant dense<0.000000e+00> : vector<16xf32>
    %161 = vector.multi_reduction <add>, %160, %cst_49 [1] : vector<16x32xf32> to vector<16xf32>
    %162 = vector.shape_cast %161 : vector<16xf32> to vector<16x1xf32>
    %cst_50 = arith.constant 3.200000e+01 : f32
    %163 = vector.broadcast %cst_50 : f32 to vector<16x1xf32>
    %164 = arith.divf %162, %163 : vector<16x1xf32>
    %165 = vector.broadcast %157 : vector<16x1xf32> to vector<16x32xf32>
    %166 = arith.subf %151, %165 : vector<16x32xf32>
    %cst_51 = arith.constant 9.99999996E-13 : f32
    %167 = vector.broadcast %cst_51 : f32 to vector<16x1xf32>
    %168 = arith.addf %164, %167 : vector<16x1xf32>
    %169 = math.rsqrt %168 : vector<16x1xf32>
    %170 = vector.broadcast %169 : vector<16x1xf32> to vector<16x32xf32>
    %171 = arith.mulf %166, %170 : vector<16x32xf32>
    %172 = vector.broadcast %152 : vector<1x32xf32> to vector<16x32xf32>
    %173 = arith.mulf %171, %172 : vector<16x32xf32>
    %174 = vector.broadcast %153 : vector<1x32xf32> to vector<16x32xf32>
    %175 = arith.addf %173, %174 : vector<16x32xf32>
    %176 = vector.extract_strided_slice %175 {offsets = [0, 0], sizes = [1, 32], strides = [1, 1]} : vector<16x32xf32> to vector<1x32xf32>
    %177 = vector.extract_strided_slice %175 {offsets = [8, 0], sizes = [1, 32], strides = [1, 1]} : vector<16x32xf32> to vector<1x32xf32>
    %178 = tpu.concatenate %176, %177 in 0 : vector<1x32xf32>, vector<1x32xf32> -> vector<2x32xf32>
    %179 = arith.truncf %178 : vector<2x32xf32> to vector<2x32xbf16>
    %c288 = arith.constant 288 : index
    %c0_52 = arith.constant 0 : index
    %180 = vector.load %arg3[%c288, %c0_52] : memref<352x128xbf16, #tpu.memory_space<vmem>>, vector<32x32xbf16>
    %cst_53 = arith.constant dense<0.000000e+00> : vector<2x32xf32>
    %181 = tpu.matmul %179, %180, %cst_53 {dimension_numbers = #tpu.dot_dimension_numbers<[1], [0], [0], [1], [0, 0, 1, 1], [], []>} : vector<2x32xbf16>, vector<32x32xbf16>, vector<2x32xf32> -> vector<2x32xf32>
    %c6 = arith.constant 6 : index
    %c0_54 = arith.constant 0 : index
    %182 = vector.load %arg2[%c6, %c0_54] : memref<16x128xf32, #tpu.memory_space<vmem>>, vector<1x32xf32>
    %183 = vector.broadcast %182 : vector<1x32xf32> to vector<2x32xf32>
    %184 = arith.addf %181, %183 : vector<2x32xf32>
    %185 = math.tanh %184 : vector<2x32xf32>
    %186 = arith.truncf %185 : vector<2x32xf32> to vector<2x32xbf16>
    %c320 = arith.constant 320 : index
    %c0_55 = arith.constant 0 : index
    %187 = vector.load %arg3[%c320, %c0_55] : memref<352x128xbf16, #tpu.memory_space<vmem>>, vector<32x128xbf16>
    %cst_56 = arith.constant dense<0.000000e+00> : vector<2x128xf32>
    %188 = tpu.matmul %186, %187, %cst_56 {dimension_numbers = #tpu.dot_dimension_numbers<[1], [0], [0], [1], [0, 0, 1, 1], [], []>} : vector<2x32xbf16>, vector<32x128xbf16>, vector<2x128xf32> -> vector<2x128xf32>
    %c9 = arith.constant 9 : index
    %c0_57 = arith.constant 0 : index
    %189 = vector.load %arg2[%c9, %c0_57] : memref<16x128xf32, #tpu.memory_space<vmem>>, vector<1x128xf32>
    %190 = vector.broadcast %189 : vector<1x128xf32> to vector<2x128xf32>
    %191 = arith.addf %188, %190 : vector<2x128xf32>
    %c0_58 = arith.constant 0 : index
    %c0_59 = arith.constant 0 : index
    %192 = vector.load %arg4[%c0_58, %c0_59] : memref<2x128xf32, #tpu.memory_space<vmem>>, vector<2x128xf32>
    tpu.vector_store %arg4[%c0_58, %c0_59], %191 {strides = array<i32>} : memref<2x128xf32, #tpu.memory_space<vmem>>, vector<2x128xf32>,
    return
  }
}

</mosaic_0001>

<llo_original>
// kernel: tpu_custom_call.1
$region0: #{tpu_custom_call.1}
  #allocation0 [shape = 'u32[]', space=smem, size = 0x4, offset = 0x4, fixed_abs, tag = 'smem constant byte address 0x4 - core index']
  #allocation1 [shape = 'u32[144,128]{1,0:T(1,128)}', space=vmem, size = 0x12000, scoped, tag = 'internal scratch']
  %s0 = inlined_call_operand.vmem [shape: s32[2], index: 0, kind: input, shape index: {}]
  %s1 = inlined_call_operand.vmem [shape: s32[16,2], index: 1, kind: input, shape index: {}]
  %s2 = inlined_call_operand.vmem [shape: f32[16,128], index: 2, kind: input, shape index: {}]
  %s3 = inlined_call_operand.hbm [shape: bf16[352,128], index: 3, kind: input, shape index: {}]
  %s4 = inlined_call_operand.hbm [shape: f32[2,128], index: 4, kind: output, shape index: {}]
  %s5 = sld [smem:[#allocation0]]
  $region34: #{tpu_custom_call.1} parent=0
    _
  %s7 = ssub.s32 1, %s5
  %s8 = scalar_select 0, %s7, %s5
  $region1: #{tpu_custom_call.1} parent=0
    #allocation2 [shape = 'u8[512]{0}', space=smem, size = 0x200, scoped, tag = 'input window, operand 0, single buffered']
    #allocation3 [shape = 's32[1]{0}', space=sflag, size = 0x4, scoped, tag = 'scoped memory for tpu_custom_call.1']
    #allocation4 [shape = 's32[1]{0}', space=sflag, size = 0x4, scoped, tag = 'scoped memory for tpu_custom_call.1']
    #allocation5 [shape = 's32[1]{0}', space=sflag, size = 0x4, scoped, tag = 'scoped memory for tpu_custom_call.1']
    #allocation6 [shape = 'u8[90112]{0}', space=vmem, size = 0x16000, scoped, tag = 'input window, operand 3, single buffered']
    #allocation7 [shape = 'u8[1024]{0}', space=vmem, size = 0x400, scoped, tag = 'output window, operand 0, single buffered']
    %9 = vsyncpa [#allocation5], 0
    %10 = vsyncpa [#allocation3], 0
    %11 = vsyncpa [#allocation4], 0
    // Predicated region
    $region2: #{tpu_custom_call.1} parent=1 // pred_check
      _
    $region3: #{tpu_custom_call.1} parent=1 // pred_check_branch
      %13 = sbr.rel (0) target = $region5
    $region4: #{tpu_custom_call.1} parent=1 // pred_region
      %s15 = ssub.s32 16, 16
      %16 = vsyncadd [#allocation5], %s15
      %s18 = sshll.u32 %s0, 4
      %s19 = int_to_ptr.vmem [resolvable:$true] %s18
      %21 = dma.vmem_to_smem %s19, 16, [#allocation2], [#allocation5]
    $region5: #{tpu_custom_call.1} parent=1 // pred_fallthru
      _
    // Predicated region
    $region6: #{tpu_custom_call.1} parent=1 // pred_check
      _
    $region7: #{tpu_custom_call.1} parent=1 // pred_check_branch
      %23 = sbr.rel (0) target = $region9
    $region8: #{tpu_custom_call.1} parent=1 // pred_region
      _
    $region9: #{tpu_custom_call.1} parent=1 // pred_fallthru
      _
    // Predicated region
    $region10: #{tpu_custom_call.1} parent=1 // pred_check
      _
    $region11: #{tpu_custom_call.1} parent=1 // pred_check_branch
      %25 = sbr.rel (0) target = $region13
    $region12: #{tpu_custom_call.1} parent=1 // pred_region
      _
    $region13: #{tpu_custom_call.1} parent=1 // pred_fallthru
      _
    // Predicated region
    $region14: #{tpu_custom_call.1} parent=1 // pred_check
      _
    $region15: #{tpu_custom_call.1} parent=1 // pred_check_branch
      %27 = sbr.rel (0) target = $region17
    $region16: #{tpu_custom_call.1} parent=1 // pred_region
      %s29 = ssub.s32 2816, 2816
      %30 = vsyncadd [#allocation3], %s29
      %s31 = sshll.u32 [#allocation6], 4
      %s32 = int_to_ptr.vmem [resolvable:$true] %s31
      %37 = dma.hbm_to_vmem [thread:$0]  %s3, 2816, %s32, [#allocation3], 64, 64, 4
    $region17: #{tpu_custom_call.1} parent=1 // pred_fallthru
      _
    // Predicated region
    $region18: #{tpu_custom_call.1} parent=1 // pred_check
      _
    $region19: #{tpu_custom_call.1} parent=1 // pred_check_branch
      %39 = sbr.rel (0) target = $region21
    $region20: #{tpu_custom_call.1} parent=1 // pred_region
      %40 = dma.done [#allocation5], 16
    $region21: #{tpu_custom_call.1} parent=1 // pred_fallthru
      _
    // Predicated region
    $region22: #{tpu_custom_call.1} parent=1 // pred_check
      _
    $region23: #{tpu_custom_call.1} parent=1 // pred_check_branch
      %42 = sbr.rel (0) target = $region25
    $region24: #{tpu_custom_call.1} parent=1 // pred_region
      %43 = dma.done [#allocation3], 2816
    $region25: #{tpu_custom_call.1} parent=1 // pred_fallthru
      _
    %44 = sfence
    %v46 = vld [vmem:[%s1] sm:$0xff]
    %v47 = vld [vmem:[%s1 + $0x8] sm:$0xff]
    %v48 = vlaneseq
    %v49 = vshrl.u32 %v48, 7
    %v50 = vadd.s32 %v49, 8
    %v51 = vand.u32 %v49, 7
    %v52 = vand.u32 %v50, 7
    %v53 = vlaneseq
    %v54 = vand.u32 %v53, 127
    %55 = vset.pattern.permute.xlu0 0
    %56 = vperm.xlu0 %55, %v46
    %v57 = vpop.permute.xlu0 %56
    %58 = vset.pattern.permute.xlu0 0
    %59 = vperm.xlu0 %58, %v47
    %v60 = vpop.permute.xlu0 %59
    %vm61 = vcmp.eq.s32.totalorder %v54, %v57
    %vm62 = vcmp.eq.s32.totalorder %v54, %v60
    %v63 = vadd.s32 %v46, 64
    %v64 = vadd.s32 %v47, 64
    %65 = vset.pattern.permute.xlu0 1
    %66 = vperm.xlu0 %65, %v63
    %v67 = vpop.permute.xlu0 %66
    %68 = vset.pattern.permute.xlu0 1
    %69 = vperm.xlu0 %68, %v64
    %v70 = vpop.permute.xlu0 %69
    %vm71 = vcmp.eq.s32.totalorder %v54, %v67
    %vm72 = vcmp.eq.s32.totalorder %v54, %v70
    %vm73 = vmor %vm61, %vm71
    %vm74 = vmor %vm62, %vm72
    %v75 = vadd.s32 %v51, 66
    %v76 = vadd.s32 %v52, 66
    %vm77 = vcmp.eq.s32.totalorder %v54, %v75
    %vm78 = vcmp.eq.s32.totalorder %v54, %v76
    %vm79 = vmor %vm73, %vm77
    %vm80 = vmor %vm74, %vm78
    %v81 = vsel %vm79, 1, 0
    %v82 = vsel %vm80, 1, 0
    %v83 = vcvt.s32.f32 %v81
    %v84 = vcvt.s32.f32 %v82
    %v85 = vpack.c.bf16 %v84, %v83
    %v86 = vld [vmem:[#allocation6] sm:$0xf]
    %v87 = vld [vmem:[#allocation6 + $0x4] sm:$0xf]
    %v88 = vld [vmem:[#allocation6 + $0x8] sm:$0xf]
    %v89 = vld [vmem:[#allocation6 + $0xc] sm:$0xf]
    %v90 = vld [vmem:[#allocation6 + $0x10] sm:$0xf]
    %v91 = vld [vmem:[#allocation6 + $0x14] sm:$0xf]
    %v92 = vld [vmem:[#allocation6 + $0x18] sm:$0xf]
    %v93 = vld [vmem:[#allocation6 + $0x1c] sm:$0xf]
    %v94 = vld [vmem:[#allocation6 + $0x20] sm:$0xf]
    %v95 = vld [vmem:[#allocation6 + $0x24] sm:$0xf]
    %v96 = vld [vmem:[#allocation6 + $0x28] sm:$0xf]
    %v97 = vld [vmem:[#allocation6 + $0x2c] sm:$0xf]
    %v98 = vld [vmem:[#allocation6 + $0x30] sm:$0xf]
    %v99 = vld [vmem:[#allocation6 + $0x34] sm:$0xf]
    %v100 = vld [vmem:[#allocation6 + $0x38] sm:$0xf]
    %v101 = vld [vmem:[#allocation6 + $0x3c] sm:$0xf]
    %v118 = vunpack.c.l.b16 %v86
    %v119 = vunpack.c.l.b16 %v87
    %v120 = vunpack.c.l.b16 %v88
    %v121 = vunpack.c.l.b16 %v89
    %v122 = vunpack.c.l.b16 %v90
    %v123 = vunpack.c.l.b16 %v91
    %v124 = vunpack.c.l.b16 %v92
    %v125 = vunpack.c.l.b16 %v93
    %v126 = vunpack.c.l.b16 %v94
    %v127 = vunpack.c.l.b16 %v95
    %v128 = vunpack.c.l.b16 %v96
    %v129 = vunpack.c.l.b16 %v97
    %v130 = vunpack.c.l.b16 %v98
    %v131 = vunpack.c.l.b16 %v99
    %v132 = vunpack.c.l.b16 %v100
    %v133 = vunpack.c.l.b16 %v101
    %v134 = vpack.c.b16 %v119, %v118
    %v135 = vpack.c.b16 %v121, %v120
    %v136 = vpack.c.b16 %v123, %v122
    %v137 = vpack.c.b16 %v125, %v124
    %v138 = vpack.c.b16 %v127, %v126
    %v139 = vpack.c.b16 %v129, %v128
    %v140 = vpack.c.b16 %v131, %v130
    %v141 = vpack.c.b16 %v133, %v132
    %150 = vmatprep.subr.bf16.mxu0 0
    %151 = vmatpush1.bf16.msra.mxu0 %v134
    %152 = vmatprep.subr.bf16.mxu0 0
    %153 = vmatpush1.bf16.msra.mxu0 %v135
    %154 = vmatprep.subr.bf16.mxu0 0
    %155 = vmatpush1.bf16.msra.mxu0 %v136
    %156 = vmatprep.subr.bf16.mxu0 0
    %157 = vmatpush1.bf16.msra.mxu0 %v137
    %158 = vmatprep.subr.bf16.mxu0 0
    %159 = vmatpush1.bf16.msra.mxu0 %v138
    %160 = vmatprep.subr.bf16.mxu0 0
    %161 = vmatpush1.bf16.msra.mxu0 %v139
    %162 = vmatprep.subr.bf16.mxu0 0
    %163 = vmatpush1.bf16.msra.mxu0 %v140
    %164 = vmatprep.subr.bf16.mxu0 0
    %165 = vmatpush1.bf16.msra.mxu0 %v141
    %166 = vmatprep.subr.bf16.mxu0 0
    %167 = vmatpush1.bf16.msra.mxu0 0
    %168 = vmatprep.subr.bf16.mxu0 0
    %169 = vmatpush1.bf16.msra.mxu0 0
    %170 = vmatprep.subr.bf16.mxu0 0
    %171 = vmatpush1.bf16.msra.mxu0 0
    %172 = vmatprep.subr.bf16.mxu0 0
    %173 = vmatpush1.bf16.msra.mxu0 0
    %174 = vmatprep.subr.bf16.mxu0 0
    %175 = vmatpush1.bf16.msra.mxu0 0
    %176 = vmatprep.subr.bf16.mxu0 0
    %177 = vmatpush1.bf16.msra.mxu0 0
    %178 = vmatprep.subr.bf16.mxu0 0
    %179 = vmatpush1.bf16.msra.mxu0 0
    %180 = vmatprep.subr.bf16.mxu0 0
    %181 = vmatpush1.bf16.msra.mxu0 0
    %182 = vmatprep.mubr.bf16.mxu0 0
    %183 = vmatmul.mubr.bf16.gmra.mrb[0].mxu0 %v85
    %v184 = vpop.f32.mrb[0].mxu0
    %v185 = vadd.f32 0.0, %v184
    %v186 = vpop.f32.mrb[0].mxu0
    %v187 = vpop.f32.mrb[0].mxu0
    %v188 = vadd.f32 0.0, %v187
    %v189 = vpop.f32.mrb[0].mxu0
    %190 = vdwg.mxu0
    %v191 = vshra.s32 %v54, 3
    %v192 = vand.u32 %v54, 7
    %vm193 = vcmp.eq.s32.totalorder %v191, 0
    %s194 = sld [smem:[#allocation2]]
    %v195 = vstv %s194
    %v196 = vsel %vm193, %v195, 0
    %vm197 = vcmp.eq.s32.totalorder %v191, 1
    %s198 = sld [smem:[#allocation2 + $0x1]]
    %v199 = vstv %s198
    %v200 = vsel %vm197, %v199, %v196
    %vm201 = vcmp.lt.s32.totalorder %v192, %v200
    %v202 = vshra.s32 %v49, 3
    %v203 = vshra.s32 %v50, 3
    %vm204 = vcmp.eq.s32.totalorder %v202, %v191
    %vm205 = vcmp.eq.s32.totalorder %v203, %v191
    %v206 = vsel %vm201, 1, 0
    %vm207 = vcmp.eq.s32.totalorder %v206, 1
    %vm208 = vmand %vm204, %vm207
    %vm209 = vmand %vm205, %vm207
    %v210 = vsel %vm208, 0.0, -1e+09
    %v211 = vsel %vm209, 0.0, -1e+09
    %v212 = vpack.c.bf16 %v188, %v185
    %v213 = vld [vmem:[#allocation6 + $0x40] sm:$0xf]
    %v214 = vld [vmem:[#allocation6 + $0x44] sm:$0xf]
    %v215 = vld [vmem:[#allocation6 + $0x48] sm:$0xf]
    %v216 = vld [vmem:[#allocation6 + $0x4c] sm:$0xf]
    %v217 = vld [vmem:[%s2 + $0x7] sm:$0x1]
    %v218 = vlaneseq
    %v219 = vshrl.u32 %v218, 7
    %v220 = vsub.s32 0, %v219
    %v221 = vrot.slane %v217, %v220
    %v226 = vunpack.c.l.b16 %v213
    %v227 = vunpack.c.l.b16 %v214
    %v228 = vunpack.c.l.b16 %v215
    %v229 = vunpack.c.l.b16 %v216
    %v230 = vpack.c.b16 %v227, %v226
    %v231 = vpack.c.b16 %v229, %v228
    %vm234 = vcmask 261120
    %v236 = vsel %vm234, %v212, 0
    %238 = vmatprep.subr.bf16.mxu0 0
    %239 = vmatpush1.bf16.msra.mxu0 %v230
    %240 = vmatprep.subr.bf16.mxu0 0
    %241 = vmatpush1.bf16.msra.mxu0 %v231
    %242 = vmatprep.subr.bf16.mxu0 0
    %243 = vmatpush1.bf16.msra.mxu0 0
    %244 = vmatprep.subr.bf16.mxu0 0
    %245 = vmatpush1.bf16.msra.mxu0 0
    %246 = vmatprep.subr.bf16.mxu0 0
    %247 = vmatpush1.bf16.msra.mxu0 0
    %248 = vmatprep.subr.bf16.mxu0 0
    %249 = vmatpush1.bf16.msra.mxu0 0
    %250 = vmatprep.subr.bf16.mxu0 0
    %251 = vmatpush1.bf16.msra.mxu0 0
    %252 = vmatprep.subr.bf16.mxu0 0
    %253 = vmatpush1.bf16.msra.mxu0 0
    %254 = vmatprep.subr.bf16.mxu0 0
    %255 = vmatpush1.bf16.msra.mxu0 0
    %256 = vmatprep.subr.bf16.mxu0 0
    %257 = vmatpush1.bf16.msra.mxu0 0
    %258 = vmatprep.subr.bf16.mxu0 0
    %259 = vmatpush1.bf16.msra.mxu0 0
    %260 = vmatprep.subr.bf16.mxu0 0
    %261 = vmatpush1.bf16.msra.mxu0 0
    %262 = vmatprep.subr.bf16.mxu0 0
    %263 = vmatpush1.bf16.msra.mxu0 0
    %264 = vmatprep.subr.bf16.mxu0 0
    %265 = vmatpush1.bf16.msra.mxu0 0
    %266 = vmatprep.subr.bf16.mxu0 0
    %267 = vmatpush1.bf16.msra.mxu0 0
    %268 = vmatprep.subr.bf16.mxu0 0
    %269 = vmatpush1.bf16.msra.mxu0 0
    %270 = vmatprep.mubr.bf16.mxu0 0
    %271 = vmatmul.mubr.bf16.gmra.mrb[0].mxu0 %v236
    %v272 = vpop.f32.mrb[0].mxu0
    %v273 = vadd.f32 %v221, %v272
    %v274 = vpop.f32.mrb[0].mxu0
    %v275 = vpop.f32.mrb[0].mxu0
    %v276 = vadd.f32 %v221, %v275
    %v277 = vpop.f32.mrb[0].mxu0
    %278 = vdwg.mxu0
    %v279 = vpack.c.bf16 %v276, %v273
    %281 = vrot.lane.b32.xlu0 %v279, 96
    %v282 = vpop.permute.xlu0 %281
    %vm283 = vcmask 130048
    %v285 = vsel %vm283, %v279, 0
    %v288 = vsel %vm283, %v282, 0
    %290 = vmatprep.subr.bf16.mxu0 0
    %291 = vmatpush1.bf16.xpose.msra.mxu0 %v288
    %292 = vmatprep.subr.bf16.mxu0 0
    %293 = vmatpush1.bf16.xpose.msra.mxu0 0
    %294 = vmatprep.subr.bf16.mxu0 0
    %295 = vmatpush1.bf16.xpose.msra.mxu0 0
    %296 = vmatprep.subr.bf16.mxu0 0
    %297 = vmatpush1.bf16.xpose.msra.mxu0 0
    %298 = vmatprep.subr.bf16.mxu0 0
    %299 = vmatpush1.bf16.xpose.msra.mxu0 0
    %300 = vmatprep.subr.bf16.mxu0 0
    %301 = vmatpush1.bf16.xpose.msra.mxu0 0
    %302 = vmatprep.subr.bf16.mxu0 0
    %303 = vmatpush1.bf16.xpose.msra.mxu0 0
    %304 = vmatprep.subr.bf16.mxu0 0
    %305 = vmatpush1.bf16.xpose.msra.mxu0 0
    %306 = vmatprep.subr.bf16.mxu0 0
    %307 = vmatpush1.bf16.xpose.msra.mxu0 0
    %308 = vmatprep.subr.bf16.mxu0 0
    %309 = vmatpush1.bf16.xpose.msra.mxu0 0
    %310 = vmatprep.subr.bf16.mxu0 0
    %311 = vmatpush1.bf16.xpose.msra.mxu0 0
    %312 = vmatprep.subr.bf16.mxu0 0
    %313 = vmatpush1.bf16.xpose.msra.mxu0 0
    %314 = vmatprep.subr.bf16.mxu0 0
    %315 = vmatpush1.bf16.xpose.msra.mxu0 0
    %316 = vmatprep.subr.bf16.mxu0 0
    %317 = vmatpush1.bf16.xpose.msra.mxu0 0
    %318 = vmatprep.subr.bf16.mxu0 0
    %319 = vmatpush1.bf16.xpose.msra.mxu0 0
    %320 = vmatprep.subr.bf16.mxu0 0
    %321 = vmatpush1.bf16.xpose.msra.mxu0 0
    %322 = vmatprep.mubr.bf16.mxu0 0
    %323 = vmatmul.mubr.bf16.gmra.mrb[0].mxu0 %v285
    %v324 = vpop.f32.mrb[0].mxu0
    %v325 = vadd.f32 0.0, %v324
    %v326 = vpop.f32.mrb[0].mxu0
    %v327 = vpop.f32.mrb[0].mxu0
    %v328 = vadd.f32 0.0, %v327
    %v329 = vpop.f32.mrb[0].mxu0
    %330 = vdwg.mxu0
    %v331 = vmul.f32 %v325, 0.25
    %v332 = vmul.f32 %v328, 0.25
    %v333 = vadd.f32 %v331, %v210
    %v334 = vadd.f32 %v332, %v211
    %v335 = vmul.f32 %v333, 1.442695
    %v336 = vpow.pop %v335
    %v337 = vmul.f32 %v334, 1.442695
    %v338 = vpow.pop %v337
    %v339 = vsel %vm283, %v336, 0.0
    %340 = vadd.xlane.f32.xlu0 %v339
    %v341 = vpop.xlane.xlu0 %340
    %v342 = vsel %vm283, %v338, 0.0
    %343 = vadd.xlane.f32.xlu0 %v342
    %v344 = vpop.xlane.xlu0 %343
    %v345 = vrcp.pop %v341
    %v346 = vrcp.pop %v344
    %v347 = vmul.f32 %v336, %v345
    %v348 = vmul.f32 %v338, %v346
    %v349 = vpack.c.bf16 %v348, %v347
    %350 = vrot.lane.b32.xlu0 %v279, 64
    %v351 = vpop.permute.xlu0 %350
    %v354 = vsel %vm283, %v349, 0
    %356 = vmatprep.subr.bf16.mxu0 0
    %357 = vmatpush1.bf16.msra.mxu0 %v351
    %358 = vmatprep.subr.bf16.mxu0 0
    %359 = vmatpush1.bf16.msra.mxu0 0
    %360 = vmatprep.subr.bf16.mxu0 0
    %361 = vmatpush1.bf16.msra.mxu0 0
    %362 = vmatprep.subr.bf16.mxu0 0
    %363 = vmatpush1.bf16.msra.mxu0 0
    %364 = vmatprep.subr.bf16.mxu0 0
    %365 = vmatpush1.bf16.msra.mxu0 0
    %366 = vmatprep.subr.bf16.mxu0 0
    %367 = vmatpush1.bf16.msra.mxu0 0
    %368 = vmatprep.subr.bf16.mxu0 0
    %369 = vmatpush1.bf16.msra.mxu0 0
    %370 = vmatprep.subr.bf16.mxu0 0
    %371 = vmatpush1.bf16.msra.mxu0 0
    %372 = vmatprep.subr.bf16.mxu0 0
    %373 = vmatpush1.bf16.msra.mxu0 0
    %374 = vmatprep.subr.bf16.mxu0 0
    %375 = vmatpush1.bf16.msra.mxu0 0
    %376 = vmatprep.subr.bf16.mxu0 0
    %377 = vmatpush1.bf16.msra.mxu0 0
    %378 = vmatprep.subr.bf16.mxu0 0
    %379 = vmatpush1.bf16.msra.mxu0 0
    %380 = vmatprep.subr.bf16.mxu0 0
    %381 = vmatpush1.bf16.msra.mxu0 0
    %382 = vmatprep.subr.bf16.mxu0 0
    %383 = vmatpush1.bf16.msra.mxu0 0
    %384 = vmatprep.subr.bf16.mxu0 0
    %385 = vmatpush1.bf16.msra.mxu0 0
    %386 = vmatprep.subr.bf16.mxu0 0
    %387 = vmatpush1.bf16.msra.mxu0 0
    %388 = vmatprep.mubr.bf16.mxu0 0
    %389 = vmatmul.mubr.bf16.gmra.mrb[0].mxu0 %v354
    %v390 = vpop.f32.mrb[0].mxu0
    %v391 = vadd.f32 0.0, %v390
    %v392 = vpop.f32.mrb[0].mxu0
    %v393 = vpop.f32.mrb[0].mxu0
    %v394 = vadd.f32 0.0, %v393
    %v395 = vpop.f32.mrb[0].mxu0
    %396 = vdwg.mxu0
    %397 = vrot.lane.b32.xlu0 %v279, 112
    %v398 = vpop.permute.xlu0 %397
    %399 = vrot.lane.b32.xlu0 %v279, 80
    %v400 = vpop.permute.xlu0 %399
    %v402 = vsel %vm283, %v398, 0
    %v405 = vsel %vm283, %v400, 0
    %407 = vmatprep.subr.bf16.mxu0 0
    %408 = vmatpush1.bf16.xpose.msra.mxu0 %v405
    %409 = vmatprep.subr.bf16.mxu0 0
    %410 = vmatpush1.bf16.xpose.msra.mxu0 0
    %411 = vmatprep.subr.bf16.mxu0 0
    %412 = vmatpush1.bf16.xpose.msra.mxu0 0
    %413 = vmatprep.subr.bf16.mxu0 0
    %414 = vmatpush1.bf16.xpose.msra.mxu0 0
    %415 = vmatprep.subr.bf16.mxu0 0
    %416 = vmatpush1.bf16.xpose.msra.mxu0 0
    %417 = vmatprep.subr.bf16.mxu0 0
    %418 = vmatpush1.bf16.xpose.msra.mxu0 0
    %419 = vmatprep.subr.bf16.mxu0 0
    %420 = vmatpush1.bf16.xpose.msra.mxu0 0
    %421 = vmatprep.subr.bf16.mxu0 0
    %422 = vmatpush1.bf16.xpose.msra.mxu0 0
    %423 = vmatprep.subr.bf16.mxu0 0
    %424 = vmatpush1.bf16.xpose.msra.mxu0 0
    %425 = vmatprep.subr.bf16.mxu0 0
    %426 = vmatpush1.bf16.xpose.msra.mxu0 0
    %427 = vmatprep.subr.bf16.mxu0 0
    %428 = vmatpush1.bf16.xpose.msra.mxu0 0
    %429 = vmatprep.subr.bf16.mxu0 0
    %430 = vmatpush1.bf16.xpose.msra.mxu0 0
    %431 = vmatprep.subr.bf16.mxu0 0
    %432 = vmatpush1.bf16.xpose.msra.mxu0 0
    %433 = vmatprep.subr.bf16.mxu0 0
    %434 = vmatpush1.bf16.xpose.msra.mxu0 0
    %435 = vmatprep.subr.bf16.mxu0 0
    %436 = vmatpush1.bf16.xpose.msra.mxu0 0
    %437 = vmatprep.subr.bf16.mxu0 0
    %438 = vmatpush1.bf16.xpose.msra.mxu0 0
    %439 = vmatprep.mubr.bf16.mxu0 0
    %440 = vmatmul.mubr.bf16.gmra.mrb[0].mxu0 %v402
    %v441 = vpop.f32.mrb[0].mxu0
    %v442 = vadd.f32 0.0, %v441
    %v443 = vpop.f32.mrb[0].mxu0
    %v444 = vpop.f32.mrb[0].mxu0
    %v445 = vadd.f32 0.0, %v444
    %v446 = vpop.f32.mrb[0].mxu0
    %447 = vdwg.mxu0
    %v448 = vmul.f32 %v442, 0.25
    %v449 = vmul.f32 %v445, 0.25
    %v450 = vadd.f32 %v448, %v210
    %v451 = vadd.f32 %v449, %v211
    %v452 = vmul.f32 %v450, 1.442695
    %v453 = vpow.pop %v452
    %v454 = vmul.f32 %v451, 1.442695
    %v455 = vpow.pop %v454
    %v456 = vsel %vm283, %v453, 0.0
    %457 = vadd.xlane.f32.xlu0 %v456
    %v458 = vpop.xlane.xlu0 %457
    %v459 = vsel %vm283, %v455, 0.0
    %460 = vadd.xlane.f32.xlu0 %v459
    %v461 = vpop.xlane.xlu0 %460
    %v462 = vrcp.pop %v458
    %v463 = vrcp.pop %v461
    %v464 = vmul.f32 %v453, %v462
    %v465 = vmul.f32 %v455, %v463
    %v466 = vpack.c.bf16 %v465, %v464
    %467 = vrot.lane.b32.xlu0 %v279, 48
    %v468 = vpop.permute.xlu0 %467
    %v471 = vsel %vm283, %v466, 0
    %473 = vmatprep.subr.bf16.mxu0 0
    %474 = vmatpush1.bf16.msra.mxu0 %v468
    %475 = vmatprep.subr.bf16.mxu0 0
    %476 = vmatpush1.bf16.msra.mxu0 0
    %477 = vmatprep.subr.bf16.mxu0 0
    %478 = vmatpush1.bf16.msra.mxu0 0
    %479 = vmatprep.subr.bf16.mxu0 0
    %480 = vmatpush1.bf16.msra.mxu0 0
    %481 = vmatprep.subr.bf16.mxu0 0
    %482 = vmatpush1.bf16.msra.mxu0 0
    %483 = vmatprep.subr.bf16.mxu0 0
    %484 = vmatpush1.bf16.msra.mxu0 0
    %485 = vmatprep.subr.bf16.mxu0 0
    %486 = vmatpush1.bf16.msra.mxu0 0
    %487 = vmatprep.subr.bf16.mxu0 0
    %488 = vmatpush1.bf16.msra.mxu0 0
    %489 = vmatprep.subr.bf16.mxu0 0
    %490 = vmatpush1.bf16.msra.mxu0 0
    %491 = vmatprep.subr.bf16.mxu0 0
    %492 = vmatpush1.bf16.msra.mxu0 0
    %493 = vmatprep.subr.bf16.mxu0 0
    %494 = vmatpush1.bf16.msra.mxu0 0
    %495 = vmatprep.subr.bf16.mxu0 0
    %496 = vmatpush1.bf16.msra.mxu0 0
    %497 = vmatprep.subr.bf16.mxu0 0
    %498 = vmatpush1.bf16.msra.mxu0 0
    %499 = vmatprep.subr.bf16.mxu0 0
    %500 = vmatpush1.bf16.msra.mxu0 0
    %501 = vmatprep.subr.bf16.mxu0 0
    %502 = vmatpush1.bf16.msra.mxu0 0
    %503 = vmatprep.subr.bf16.mxu0 0
    %504 = vmatpush1.bf16.msra.mxu0 0
    %505 = vmatprep.mubr.bf16.mxu0 0
    %506 = vmatmul.mubr.bf16.gmra.mrb[0].mxu0 %v471
    %v507 = vpop.f32.mrb[0].mxu0
    %v508 = vadd.f32 0.0, %v507
    %v509 = vpop.f32.mrb[0].mxu0
    %v510 = vpop.f32.mrb[0].mxu0
    %v511 = vadd.f32 0.0, %v510
    %v512 = vpop.f32.mrb[0].mxu0
    %513 = vdwg.mxu0
    %516 = vrot.lane.b32.xlu0 %v508, 16
    %v517 = vpop.permute.xlu0 %516
    %518 = vrot.lane.b32.xlu0 %v511, 16
    %v519 = vpop.permute.xlu0 %518
    %v522 = vsel %vm283, %v391, %v517
    %v523 = vsel %vm283, %v394, %v519
    %v524 = vpack.c.bf16 %v523, %v522
    %v525 = vld [vmem:[#allocation6 + $0x50] sm:$0xf]
    %v526 = vld [vmem:[#allocation6 + $0x54] sm:$0xf]
    %v527 = vld [vmem:[#allocation6 + $0x58] sm:$0xf]
    %v528 = vld [vmem:[#allocation6 + $0x5c] sm:$0xf]
    %v529 = vld [vmem:[%s2 + $0x4] sm:$0x1]
    %v530 = vlaneseq
    %v531 = vshrl.u32 %v530, 7
    %v532 = vsub.s32 0, %v531
    %v533 = vrot.slane %v529, %v532
    %v538 = vunpack.c.l.b16 %v525
    %v539 = vunpack.c.l.b16 %v526
    %v540 = vunpack.c.l.b16 %v527
    %v541 = vunpack.c.l.b16 %v528
    %v542 = vpack.c.b16 %v539, %v538
    %v543 = vpack.c.b16 %v541, %v540
    %v547 = vsel %vm234, %v524, 0
    %549 = vmatprep.subr.bf16.mxu0 0
    %550 = vmatpush1.bf16.msra.mxu0 %v542
    %551 = vmatprep.subr.bf16.mxu0 0
    %552 = vmatpush1.bf16.msra.mxu0 %v543
    %553 = vmatprep.subr.bf16.mxu0 0
    %554 = vmatpush1.bf16.msra.mxu0 0
    %555 = vmatprep.subr.bf16.mxu0 0
    %556 = vmatpush1.bf16.msra.mxu0 0
    %557 = vmatprep.subr.bf16.mxu0 0
    %558 = vmatpush1.bf16.msra.mxu0 0
    %559 = vmatprep.subr.bf16.mxu0 0
    %560 = vmatpush1.bf16.msra.mxu0 0
    %561 = vmatprep.subr.bf16.mxu0 0
    %562 = vmatpush1.bf16.msra.mxu0 0
    %563 = vmatprep.subr.bf16.mxu0 0
    %564 = vmatpush1.bf16.msra.mxu0 0
    %565 = vmatprep.subr.bf16.mxu0 0
    %566 = vmatpush1.bf16.msra.mxu0 0
    %567 = vmatprep.subr.bf16.mxu0 0
    %568 = vmatpush1.bf16.msra.mxu0 0
    %569 = vmatprep.subr.bf16.mxu0 0
    %570 = vmatpush1.bf16.msra.mxu0 0
    %571 = vmatprep.subr.bf16.mxu0 0
    %572 = vmatpush1.bf16.msra.mxu0 0
    %573 = vmatprep.subr.bf16.mxu0 0
    %574 = vmatpush1.bf16.msra.mxu0 0
    %575 = vmatprep.subr.bf16.mxu0 0
    %576 = vmatpush1.bf16.msra.mxu0 0
    %577 = vmatprep.subr.bf16.mxu0 0
    %578 = vmatpush1.bf16.msra.mxu0 0
    %579 = vmatprep.subr.bf16.mxu0 0
    %580 = vmatpush1.bf16.msra.mxu0 0
    %581 = vmatprep.mubr.bf16.mxu0 0
    %582 = vmatmul.mubr.bf16.gmra.mrb[0].mxu0 %v547
    %v583 = vpop.f32.mrb[0].mxu0
    %v584 = vadd.f32 %v533, %v583
    %v585 = vpop.f32.mrb[0].mxu0
    %v586 = vpop.f32.mrb[0].mxu0
    %v587 = vadd.f32 %v533, %v586
    %v588 = vpop.f32.mrb[0].mxu0
    %589 = vdwg.mxu0
    %v590 = vadd.f32 %v185, %v584
    %v591 = vadd.f32 %v188, %v587
    %v592 = vld [vmem:[%s2] sm:$0x1]
    %v593 = vld [vmem:[%s2 + $0x1] sm:$0x1]
    %v594 = vsel %vm234, %v590, 0.0
    %595 = vadd.xlane.f32.xlu0 %v594
    %v596 = vpop.xlane.xlu0 %595
    %v597 = vsel %vm234, %v591, 0.0
    %598 = vadd.xlane.f32.xlu0 %v597
    %v599 = vpop.xlane.xlu0 %598
    %v600 = vrcp.pop 32.0
    %v601 = vmul.f32 %v596, %v600
    %v602 = vmul.f32 %v599, %v600
    %v603 = vsub.f32 %v590, %v601
    %v604 = vsub.f32 %v591, %v602
    %v605 = vmul.f32 %v603, %v603
    %v606 = vmul.f32 %v604, %v604
    %v607 = vsel %vm234, %v605, 0.0
    %608 = vadd.xlane.f32.xlu0 %v607
    %v609 = vpop.xlane.xlu0 %608
    %v610 = vsel %vm234, %v606, 0.0
    %611 = vadd.xlane.f32.xlu0 %v610
    %v612 = vpop.xlane.xlu0 %611
    %v613 = vmul.f32 %v609, %v600
    %v614 = vmul.f32 %v612, %v600
    %v615 = vadd.f32 %v613, 1e-12
    %v616 = vadd.f32 %v614, 1e-12
    %v617 = vrsqrt.pop %v615
    %v618 = vrsqrt.pop %v616
    %v619 = vmul.f32 %v603, %v617
    %v620 = vmul.f32 %v604, %v618
    %v621 = vlaneseq
    %v622 = vshrl.u32 %v621, 7
    %v623 = vsub.s32 0, %v622
    %v624 = vrot.slane %v592, %v623
    %v625 = vmul.f32 %v619, %v624
    %v626 = vmul.f32 %v620, %v624
    %v627 = vlaneseq
    %v628 = vshrl.u32 %v627, 7
    %v629 = vsub.s32 0, %v628
    %v630 = vrot.slane %v593, %v629
    %v631 = vadd.f32 %v625, %v630
    %v632 = vadd.f32 %v626, %v630
    %v633 = vpack.c.bf16 %v632, %v631
    %v634 = vld [vmem:[#allocation6 + $0x60] sm:$0xf]
    %v635 = vld [vmem:[#allocation6 + $0x64] sm:$0xf]
    %v636 = vld [vmem:[#allocation6 + $0x68] sm:$0xf]
    %v637 = vld [vmem:[#allocation6 + $0x6c] sm:$0xf]
    %v638 = vld [vmem:[%s2 + $0x8] sm:$0x1]
    %v639 = vlaneseq
    %v640 = vshrl.u32 %v639, 7
    %v641 = vsub.s32 0, %v640
    %v642 = vrot.slane %v638, %v641
    %v647 = vunpack.c.l.b16 %v634
    %v648 = vunpack.c.l.b16 %v635
    %v649 = vunpack.c.l.b16 %v636
    %v650 = vunpack.c.l.b16 %v637
    %v651 = vpack.c.b16 %v648, %v647
    %v652 = vpack.c.b16 %v650, %v649
    %v656 = vsel %vm234, %v633, 0
    %658 = vmatprep.subr.bf16.mxu0 0
    %659 = vmatpush1.bf16.msra.mxu0 %v651
    %660 = vmatprep.subr.bf16.mxu0 0
    %661 = vmatpush1.bf16.msra.mxu0 %v652
    %662 = vmatprep.subr.bf16.mxu0 0
    %663 = vmatpush1.bf16.msra.mxu0 0
    %664 = vmatprep.subr.bf16.mxu0 0
    %665 = vmatpush1.bf16.msra.mxu0 0
    %666 = vmatprep.subr.bf16.mxu0 0
    %667 = vmatpush1.bf16.msra.mxu0 0
    %668 = vmatprep.subr.bf16.mxu0 0
    %669 = vmatpush1.bf16.msra.mxu0 0
    %670 = vmatprep.subr.bf16.mxu0 0
    %671 = vmatpush1.bf16.msra.mxu0 0
    %672 = vmatprep.subr.bf16.mxu0 0
    %673 = vmatpush1.bf16.msra.mxu0 0
    %674 = vmatprep.subr.bf16.mxu0 0
    %675 = vmatpush1.bf16.msra.mxu0 0
    %676 = vmatprep.subr.bf16.mxu0 0
    %677 = vmatpush1.bf16.msra.mxu0 0
    %678 = vmatprep.subr.bf16.mxu0 0
    %679 = vmatpush1.bf16.msra.mxu0 0
    %680 = vmatprep.subr.bf16.mxu0 0
    %681 = vmatpush1.bf16.msra.mxu0 0
    %682 = vmatprep.subr.bf16.mxu0 0
    %683 = vmatpush1.bf16.msra.mxu0 0
    %684 = vmatprep.subr.bf16.mxu0 0
    %685 = vmatpush1.bf16.msra.mxu0 0
    %686 = vmatprep.subr.bf16.mxu0 0
    %687 = vmatpush1.bf16.msra.mxu0 0
    %688 = vmatprep.subr.bf16.mxu0 0
    %689 = vmatpush1.bf16.msra.mxu0 0
    %690 = vmatprep.mubr.bf16.mxu0 0
    %691 = vmatmul.mubr.bf16.gmra.mrb[0].mxu0 %v656
    %v692 = vpop.f32.mrb[0].mxu0
    %v693 = vadd.f32 %v642, %v692
    %v694 = vpop.f32.mrb[0].mxu0
    %v695 = vpop.f32.mrb[0].mxu0
    %v696 = vadd.f32 %v642, %v695
    %v697 = vpop.f32.mrb[0].mxu0
    %698 = vdwg.mxu0
    %v699 = vmul.f32 %v693, 0.5
    %v700 = vmul.f32 %v696, 0.5
    %v701 = vmul.f32 %v693, 0.044715
    %v702 = vmul.f32 %v696, 0.044715
    %v703 = vmul.f32 %v701, %v693
    %v704 = vmul.f32 %v702, %v696
    %v705 = vmul.f32 %v703, %v693
    %v706 = vmul.f32 %v704, %v696
    %v707 = vadd.f32 %v693, %v705
    %v708 = vadd.f32 %v696, %v706
    %v709 = vmul.f32 %v707, 0.7978846
    %v710 = vmul.f32 %v708, 0.7978846
    %v711 = vtanh.pop %v709
    %v712 = vtanh.pop %v710
    %v713 = vadd.f32 %v711, 1.0
    %v714 = vadd.f32 %v712, 1.0
    %v715 = vmul.f32 %v699, %v713
    %v716 = vmul.f32 %v700, %v714
    %v717 = vpack.c.bf16 %v716, %v715
    %v718 = vld [vmem:[#allocation6 + $0x70] sm:$0xf]
    %v719 = vld [vmem:[#allocation6 + $0x74] sm:$0xf]
    %v720 = vld [vmem:[#allocation6 + $0x78] sm:$0xf]
    %v721 = vld [vmem:[#allocation6 + $0x7c] sm:$0xf]
    %v722 = vld [vmem:[#allocation6 + $0x80] sm:$0xf]
    %v723 = vld [vmem:[#allocation6 + $0x84] sm:$0xf]
    %v724 = vld [vmem:[#allocation6 + $0x88] sm:$0xf]
    %v725 = vld [vmem:[#allocation6 + $0x8c] sm:$0xf]
    %v726 = vld [vmem:[%s2 + $0x5] sm:$0x1]
    %v727 = vlaneseq
    %v728 = vshrl.u32 %v727, 7
    %v729 = vsub.s32 0, %v728
    %v730 = vrot.slane %v726, %v729
    %v739 = vunpack.c.l.b16 %v718
    %v740 = vunpack.c.l.b16 %v719
    %v741 = vunpack.c.l.b16 %v720
    %v742 = vunpack.c.l.b16 %v721
    %v743 = vunpack.c.l.b16 %v722
    %v744 = vunpack.c.l.b16 %v723
    %v745 = vunpack.c.l.b16 %v724
    %v746 = vunpack.c.l.b16 %v725
    %v747 = vpack.c.b16 %v740, %v739
    %v748 = vpack.c.b16 %v742, %v741
    %v749 = vpack.c.b16 %v744, %v743
    %v750 = vpack.c.b16 %v746, %v745
    %vm755 = vcmask 523264
    %v757 = vsel %vm755, %v717, 0
    %759 = vmatprep.subr.bf16.mxu0 0
    %760 = vmatpush1.bf16.msra.mxu0 %v747
    %761 = vmatprep.subr.bf16.mxu0 0
    %762 = vmatpush1.bf16.msra.mxu0 %v748
    %763 = vmatprep.subr.bf16.mxu0 0
    %764 = vmatpush1.bf16.msra.mxu0 %v749
    %765 = vmatprep.subr.bf16.mxu0 0
    %766 = vmatpush1.bf16.msra.mxu0 %v750
    %767 = vmatprep.subr.bf16.mxu0 0
    %768 = vmatpush1.bf16.msra.mxu0 0
    %769 = vmatprep.subr.bf16.mxu0 0
    %770 = vmatpush1.bf16.msra.mxu0 0
    %771 = vmatprep.subr.bf16.mxu0 0
    %772 = vmatpush1.bf16.msra.mxu0 0
    %773 = vmatprep.subr.bf16.mxu0 0
    %774 = vmatpush1.bf16.msra.mxu0 0
    %775 = vmatprep.subr.bf16.mxu0 0
    %776 = vmatpush1.bf16.msra.mxu0 0
    %777 = vmatprep.subr.bf16.mxu0 0
    %778 = vmatpush1.bf16.msra.mxu0 0
    %779 = vmatprep.subr.bf16.mxu0 0
    %780 = vmatpush1.bf16.msra.mxu0 0
    %781 = vmatprep.subr.bf16.mxu0 0
    %782 = vmatpush1.bf16.msra.mxu0 0
    %783 = vmatprep.subr.bf16.mxu0 0
    %784 = vmatpush1.bf16.msra.mxu0 0
    %785 = vmatprep.subr.bf16.mxu0 0
    %786 = vmatpush1.bf16.msra.mxu0 0
    %787 = vmatprep.subr.bf16.mxu0 0
    %788 = vmatpush1.bf16.msra.mxu0 0
    %789 = vmatprep.subr.bf16.mxu0 0
    %790 = vmatpush1.bf16.msra.mxu0 0
    %791 = vmatprep.mubr.bf16.mxu0 0
    %792 = vmatmul.mubr.bf16.gmra.mrb[0].mxu0 %v757
    %v793 = vpop.f32.mrb[0].mxu0
    %v794 = vadd.f32 %v730, %v793
    %v795 = vpop.f32.mrb[0].mxu0
    %v796 = vpop.f32.mrb[0].mxu0
    %v797 = vadd.f32 %v730, %v796
    %v798 = vpop.f32.mrb[0].mxu0
    %799 = vdwg.mxu0
    %v800 = vadd.f32 %v631, %v794
    %v801 = vadd.f32 %v632, %v797
    %v802 = vld [vmem:[%s2 + $0x2] sm:$0x1]
    %v803 = vld [vmem:[%s2 + $0x3] sm:$0x1]
    %v804 = vsel %vm234, %v800, 0.0
    %805 = vadd.xlane.f32.xlu0 %v804
    %v806 = vpop.xlane.xlu0 %805
    %v807 = vsel %vm234, %v801, 0.0
    %808 = vadd.xlane.f32.xlu0 %v807
    %v809 = vpop.xlane.xlu0 %808
    %v810 = vmul.f32 %v806, %v600
    %v811 = vmul.f32 %v809, %v600
    %v812 = vsub.f32 %v800, %v810
    %v813 = vsub.f32 %v801, %v811
    %v814 = vmul.f32 %v812, %v812
    %v815 = vmul.f32 %v813, %v813
    %v816 = vsel %vm234, %v814, 0.0
    %817 = vadd.xlane.f32.xlu0 %v816
    %v818 = vpop.xlane.xlu0 %817
    %v819 = vsel %vm234, %v815, 0.0
    %820 = vadd.xlane.f32.xlu0 %v819
    %v821 = vpop.xlane.xlu0 %820
    %v822 = vmul.f32 %v818, %v600
    %v823 = vmul.f32 %v821, %v600
    %v824 = vadd.f32 %v822, 1e-12
    %v825 = vadd.f32 %v823, 1e-12
    %v826 = vrsqrt.pop %v824
    %v827 = vrsqrt.pop %v825
    %v828 = vmul.f32 %v812, %v826
    %v829 = vmul.f32 %v813, %v827
    %v830 = vlaneseq
    %v831 = vshrl.u32 %v830, 7
    %v832 = vsub.s32 0, %v831
    %v833 = vrot.slane %v802, %v832
    %v834 = vmul.f32 %v828, %v833
    %v835 = vmul.f32 %v829, %v833
    %v836 = vlaneseq
    %v837 = vshrl.u32 %v836, 7
    %v838 = vsub.s32 0, %v837
    %v839 = vrot.slane %v803, %v838
    %v840 = vadd.f32 %v834, %v839
    %v841 = vadd.f32 %v835, %v839
    %v843 = vrot.slane %v841, 7
    %vm845 = vcmask 1040384
    %v846 = vsel %vm845, %v840, %v843
    %v847 = vpack.c.bf16 %v846, %v846
    %v848 = vld [vmem:[#allocation6 + $0x90] sm:$0xf]
    %v849 = vld [vmem:[#allocation6 + $0x94] sm:$0xf]
    %v850 = vld [vmem:[#allocation6 + $0x98] sm:$0xf]
    %v851 = vld [vmem:[#allocation6 + $0x9c] sm:$0xf]
    %v852 = vld [vmem:[%s2 + $0x6] sm:$0x1]
    %v853 = vlaneseq
    %v854 = vshrl.u32 %v853, 7
    %v855 = vsub.s32 0, %v854
    %v856 = vrot.slane %v852, %v855
    %v861 = vunpack.c.l.b16 %v848
    %v862 = vunpack.c.l.b16 %v849
    %v863 = vunpack.c.l.b16 %v850
    %v864 = vunpack.c.l.b16 %v851
    %v865 = vpack.c.b16 %v862, %v861
    %v866 = vpack.c.b16 %v864, %v863
    %v870 = vsel %vm234, %v847, 0
    %872 = vmatprep.subr.bf16.mxu0 0
    %873 = vmatpush1.bf16.msra.mxu0 %v865
    %874 = vmatprep.subr.bf16.mxu0 0
    %875 = vmatpush1.bf16.msra.mxu0 %v866
    %876 = vmatprep.subr.bf16.mxu0 0
    %877 = vmatpush1.bf16.msra.mxu0 0
    %878 = vmatprep.subr.bf16.mxu0 0
    %879 = vmatpush1.bf16.msra.mxu0 0
    %880 = vmatprep.subr.bf16.mxu0 0
    %881 = vmatpush1.bf16.msra.mxu0 0
    %882 = vmatprep.subr.bf16.mxu0 0
    %883 = vmatpush1.bf16.msra.mxu0 0
    %884 = vmatprep.subr.bf16.mxu0 0
    %885 = vmatpush1.bf16.msra.mxu0 0
    %886 = vmatprep.subr.bf16.mxu0 0
    %887 = vmatpush1.bf16.msra.mxu0 0
    %888 = vmatprep.subr.bf16.mxu0 0
    %889 = vmatpush1.bf16.msra.mxu0 0
    %890 = vmatprep.subr.bf16.mxu0 0
    %891 = vmatpush1.bf16.msra.mxu0 0
    %892 = vmatprep.subr.bf16.mxu0 0
    %893 = vmatpush1.bf16.msra.mxu0 0
    %894 = vmatprep.subr.bf16.mxu0 0
    %895 = vmatpush1.bf16.msra.mxu0 0
    %896 = vmatprep.subr.bf16.mxu0 0
    %897 = vmatpush1.bf16.msra.mxu0 0
    %898 = vmatprep.subr.bf16.mxu0 0
    %899 = vmatpush1.bf16.msra.mxu0 0
    %900 = vmatprep.subr.bf16.mxu0 0
    %901 = vmatpush1.bf16.msra.mxu0 0
    %902 = vmatprep.subr.bf16.mxu0 0
    %903 = vmatpush1.bf16.msra.mxu0 0
    %904 = vmatprep.mubr.bf16.mxu0 0
    %905 = vmatmul.mubr.bf16.gmra.mrb[0].mxu0 %v870
    %v906 = vpop.f32.mrb[0].mxu0
    %v907 = vadd.f32 %v856, %v906
    %v908 = vpop.f32.mrb[0].mxu0
    %v909 = vpop.f32.mrb[0].mxu0
    %v910 = vpop.f32.mrb[0].mxu0
    %911 = vdwg.mxu0
    %v912 = vtanh.pop %v907
    %v913 = vpack.c.bf16 %v912, %v912
    %v914 = vld [vmem:[#allocation6 + $0xa0] sm:$0xf]
    %v915 = vld [vmem:[#allocation6 + $0xa4] sm:$0xf]
    %v916 = vld [vmem:[#allocation6 + $0xa8] sm:$0xf]
    %v917 = vld [vmem:[#allocation6 + $0xac] sm:$0xf]
    %v918 = vld [vmem:[%s2 + $0x9] sm:$0x1]
    %v919 = vlaneseq
    %v920 = vshrl.u32 %v919, 7
    %v921 = vsub.s32 0, %v920
    %v922 = vrot.slane %v918, %v921
    %v927 = vunpack.c.l.b16 %v914
    %v928 = vunpack.c.l.b16 %v915
    %v929 = vunpack.c.l.b16 %v916
    %v930 = vunpack.c.l.b16 %v917
    %v931 = vpack.c.b16 %v928, %v927
    %v932 = vpack.c.b16 %v930, %v929
    %v936 = vsel %vm234, %v913, 0
    %938 = vmatprep.subr.bf16.mxu0 0
    %939 = vmatpush1.bf16.msra.mxu0 %v931
    %940 = vmatprep.subr.bf16.mxu0 0
    %941 = vmatpush1.bf16.msra.mxu0 %v932
    %942 = vmatprep.subr.bf16.mxu0 0
    %943 = vmatpush1.bf16.msra.mxu0 0
    %944 = vmatprep.subr.bf16.mxu0 0
    %945 = vmatpush1.bf16.msra.mxu0 0
    %946 = vmatprep.subr.bf16.mxu0 0
    %947 = vmatpush1.bf16.msra.mxu0 0
    %948 = vmatprep.subr.bf16.mxu0 0
    %949 = vmatpush1.bf16.msra.mxu0 0
    %950 = vmatprep.subr.bf16.mxu0 0
    %951 = vmatpush1.bf16.msra.mxu0 0
    %952 = vmatprep.subr.bf16.mxu0 0
    %953 = vmatpush1.bf16.msra.mxu0 0
    %954 = vmatprep.subr.bf16.mxu0 0
    %955 = vmatpush1.bf16.msra.mxu0 0
    %956 = vmatprep.subr.bf16.mxu0 0
    %957 = vmatpush1.bf16.msra.mxu0 0
    %958 = vmatprep.subr.bf16.mxu0 0
    %959 = vmatpush1.bf16.msra.mxu0 0
    %960 = vmatprep.subr.bf16.mxu0 0
    %961 = vmatpush1.bf16.msra.mxu0 0
    %962 = vmatprep.subr.bf16.mxu0 0
    %963 = vmatpush1.bf16.msra.mxu0 0
    %964 = vmatprep.subr.bf16.mxu0 0
    %965 = vmatpush1.bf16.msra.mxu0 0
    %966 = vmatprep.subr.bf16.mxu0 0
    %967 = vmatpush1.bf16.msra.mxu0 0
    %968 = vmatprep.subr.bf16.mxu0 0
    %969 = vmatpush1.bf16.msra.mxu0 0
    %970 = vmatprep.mubr.bf16.mxu0 0
    %971 = vmatmul.mubr.bf16.gmra.mrb[0].mxu0 %v936
    %v972 = vpop.f32.mrb[0].mxu0
    %v973 = vadd.f32 %v922, %v972
    %v974 = vpop.f32.mrb[0].mxu0
    %v975 = vpop.f32.mrb[0].mxu0
    %v976 = vpop.f32.mrb[0].mxu0
    %977 = vdwg.mxu0
    %978 = vst [vmem:[#allocation7] sm:$0x3] %v973
    // Predicated region
    $region26: #{tpu_custom_call.1} parent=1 // pred_check
      _
    $region27: #{tpu_custom_call.1} parent=1 // pred_check_branch
      %980 = sbr.rel (0) target = $region29
    $region28: #{tpu_custom_call.1} parent=1 // pred_region
      %s982 = ssub.s32 32, 32
      %983 = vsyncadd [#allocation4], %s982
      %s985 = sshll.u32 [#allocation7], 4
      %s986 = int_to_ptr.vmem [resolvable:$true] %s985
      %988 = dma.vmem_to_hbm [thread:$0]  %s986, 32, %s4, [#allocation4]
    $region29: #{tpu_custom_call.1} parent=1 // pred_fallthru
      _
    // Predicated region
    $region30: #{tpu_custom_call.1} parent=1 // pred_check
      _
    $region31: #{tpu_custom_call.1} parent=1 // pred_check_branch
      %990 = sbr.rel (0) target = $region33
    $region32: #{tpu_custom_call.1} parent=1 // pred_region
      %991 = dma.done [#allocation4], 32
    $region33: #{tpu_custom_call.1} parent=1 // pred_fallthru
      _
    %992 = vsyncpa [#allocation3], 1
    %993 = vsyncpa [#allocation4], 1
    %994 = vsyncpa [#allocation5], 1

</llo_original>
